<compile_context>
chip_gen: v6e
topology: v6e:2x2x1
jax: 0.10.0
libtpu: 0.0.40
codegen_flags: <defaults>
</compile_context>

<pallas_src>
import jax
import jax.numpy as jnp
from jax.experimental import pallas as pl
from jax.experimental.pallas import tpu as pltpu


def adaptive_pad(x, target_height, target_width, *, block_batch=None):
    """Zero-pad (or crop) x (B, H, W) to (B, target_height, target_width), centered."""
    B, H, W = x.shape
    TH, TW = int(target_height), int(target_width)

    # Same arithmetic as the PyTorch module (all static Python ints).
    pad_h = TH - H
    pad_w = TW - W
    pad_top, pad_bottom = pad_h // 2, pad_h - pad_h // 2
    pad_left, pad_right = pad_w // 2, pad_w - pad_w // 2

    # Split into zero-fill amounts (non-negative pads) and crop amounts
    # (negative pads -> F.pad crops from that side).
    zt, zb = max(pad_top, 0), max(pad_bottom, 0)
    zl, zr = max(pad_left, 0), max(pad_right, 0)
    ct, cb = max(-pad_top, 0), max(-pad_bottom, 0)
    cl, cr = max(-pad_left, 0), max(-pad_right, 0)
    src_h = H - ct - cb
    src_w = W - cl - cr
    assert src_h > 0 and src_w > 0, "target size too small (fully cropped)"

    # ---- choose batch-block size TB -------------------------------------
    dtype_bytes = jnp.dtype(x.dtype).itemsize
    per_b = (H * W + TH * TW) * dtype_bytes              # in + out bytes per batch elem
    if block_batch is None:
        budget = 4 * 1024 * 1024                         # ~4 MiB combined tile
        tb = max(1, budget // per_b)
        tb = min(tb, B)
        if B >= 2:
            # keep at least 2 grid steps so the "parallel" axis can shard
            # across both TensorCores on v7x.
            tb = min(tb, pl.cdiv(B, 2))
    else:
        tb = min(int(block_batch), B)
    # Shrink to the largest divisor of B so every block is full: all stores
    # stay unmasked full-tile and no OOB masking is needed on the last step.
    while B % tb != 0:
        tb -= 1
    grid = (B // tb,)

    # ---- VMEM budget: double-buffered in+out tiles + headroom ------------
    vmem_needed = 2 * tb * per_b
    vmem_limit = min(max(2 * vmem_needed, 16 * 1024 * 1024), 64 * 1024 * 1024)

    # ---- kernel: single full-tile store of an in-register padded block ---
    def kernel(x_ref, o_ref):
        x_blk = x_ref[...]                               # (tb, H, W)
        # static crop for negative padding (no-op slice when pads >= 0)
        x_blk = x_blk[:, ct:ct + src_h, cl:cl + src_w]
        dt = x_blk.dtype

        # pad lanes (W) first, then sublanes (H); all in-register
        parts = []
        if zl:
            parts.append(jnp.zeros((tb, src_h, zl), dt))
        parts.append(x_blk)
        if zr:
            parts.append(jnp.zeros((tb, src_h, zr), dt))
        x_blk = jnp.concatenate(parts, axis=2) if len(parts) > 1 else parts[0]

        parts = []
        if zt:
            parts.append(jnp.zeros((tb, zt, TW), dt))
        parts.append(x_blk)
        if zb:
            parts.append(jnp.zeros((tb, zb, TW), dt))
        x_blk = jnp.concatenate(parts, axis=1) if len(parts) > 1 else parts[0]

        o_ref[...] = x_blk                               # one unmasked full store

    return pl.pallas_call(
        kernel,
        out_shape=jax.ShapeDtypeStruct((B, TH, TW), x.dtype),
        grid_spec=pltpu.PrefetchScalarGridSpec(
            num_scalar_prefetch=0,
            grid=grid,
            in_specs=[pl.BlockSpec((tb, H, W), lambda b: (b, 0, 0))],
            out_specs=pl.BlockSpec((tb, TH, TW), lambda b: (b, 0, 0)),
        ),
        compiler_params=pltpu.CompilerParams(
            dimension_semantics=("parallel",),
            vmem_limit_bytes=int(vmem_limit),
        ),
    )(x)


def adaptive_pad_ref(x, target_height, target_width):
    """Pure-JAX reference matching the PyTorch module (incl. negative pads)."""
    B, H, W = x.shape
    pad_h = target_height - H
    pad_w = target_width - W
    pt, pb = pad_h // 2, pad_h - pad_h // 2
    pll, pr = pad_w // 2, pad_w - pad_w // 2
    x = x[:, max(-pt, 0):H - max(-pb, 0), max(-pll, 0):W - max(-pr, 0)]
    return jnp.pad(x, ((0, 0),
                       (max(pt, 0), max(pb, 0)),
                       (max(pll, 0), max(pr, 0))))


if __name__ == "__main__":
    key = jax.random.PRNGKey(0)

    # Test 1: the module's nominal use case (small, pad-only).
    B, H, W = 2, 12, 24
    TH, TW = 16, 32
    x = jax.random.normal(key, (B, H, W), dtype=jnp.float32)
    out = jax.block_until_ready(adaptive_pad(x, TH, TW))
    ref = adaptive_pad_ref(x, TH, TW)
    assert out.shape == (B, TH, TW) and out.dtype == x.dtype
    assert jnp.allclose(out, ref), "mismatch vs reference (test 1)"

    # Test 2: larger batch so multiple batch elements share one grid step.
    B2, H2, W2 = 8, 40, 56
    TH2, TW2 = 48, 64
    x2 = jax.random.normal(jax.random.PRNGKey(1), (B2, H2, W2), dtype=jnp.float32)
    out2 = jax.block_until_ready(adaptive_pad(x2, TH2, TW2))
    ref2 = adaptive_pad_ref(x2, TH2, TW2)
    assert out2.shape == (B2, TH2, TW2)
    assert jnp.allclose(out2, ref2), "mismatch vs reference (test 2)"

    # Test 3: mixed crop + pad (target smaller in H, larger in W).
    B3, H3, W3 = 3, 20, 20
    TH3, TW3 = 16, 28
    x3 = jax.random.normal(jax.random.PRNGKey(2), (B3, H3, W3), dtype=jnp.float32)
    out3 = jax.block_until_ready(adaptive_pad(x3, TH3, TW3))
    ref3 = adaptive_pad_ref(x3, TH3, TW3)
    assert out3.shape == (B3, TH3, TW3)
    assert jnp.allclose(out3, ref3), "mismatch vs reference (test 3)"

    print("KERNEL_OK")
</pallas_src>

<mosaic_0001>
module attributes {stable_mosaic.version = 11 : i64} {
  func.func @kernel(%arg0: i32, %arg1: memref<1x12x24xf32, #tpu.memory_space<vmem>>, %arg2: memref<1x16x32xf32, #tpu.memory_space<vmem>>) attributes {dimension_semantics = [#tpu.dimension_semantics<parallel>], iteration_bounds = array<i64: 2>, scalar_prefetch = 0 : i64, scratch_operands = 0 : i64, tpu.core_type = #tpu.core_type<tc>, window_params = [{transform_indices = @transform_0, window_bounds = array<i64: 1, 12, 24>}, {transform_indices = @transform_1, window_bounds = array<i64: 1, 16, 32>}]} {
    %c0 = arith.constant 0 : index
    %c0_0 = arith.constant 0 : index
    %c0_1 = arith.constant 0 : index
    %0 = vector.load %arg1[%c0, %c0_0, %c0_1] : memref<1x12x24xf32, #tpu.memory_space<vmem>>, vector<1x12x24xf32>
    %cst = arith.constant 0.000000e+00 : f32
    %1 = vector.broadcast %cst : f32 to vector<1x12x4xf32>
    %cst_2 = arith.constant 0.000000e+00 : f32
    %2 = vector.broadcast %cst_2 : f32 to vector<1x12x4xf32>
    %3 = tpu.concatenate %1, %0, %2 in 2 : vector<1x12x4xf32>, vector<1x12x24xf32>, vector<1x12x4xf32> -> vector<1x12x32xf32>
    %cst_3 = arith.constant 0.000000e+00 : f32
    %4 = vector.broadcast %cst_3 : f32 to vector<1x2x32xf32>
    %cst_4 = arith.constant 0.000000e+00 : f32
    %5 = vector.broadcast %cst_4 : f32 to vector<1x2x32xf32>
    %6 = tpu.concatenate %4, %3, %5 in 1 : vector<1x2x32xf32>, vector<1x12x32xf32>, vector<1x2x32xf32> -> vector<1x16x32xf32>
    %c0_5 = arith.constant 0 : index
    %c0_6 = arith.constant 0 : index
    %c0_7 = arith.constant 0 : index
    %7 = vector.load %arg2[%c0_5, %c0_6, %c0_7] : memref<1x16x32xf32, #tpu.memory_space<vmem>>, vector<1x16x32xf32>
    tpu.vector_store %arg2[%c0_5, %c0_6, %c0_7], %6 {strides = array<i32>} : memref<1x16x32xf32, #tpu.memory_space<vmem>>, vector<1x16x32xf32>,
    return
  }
  func.func @transform_0(%arg0: i32) -> (i32, i32, i32) {
    %c0_i32 = arith.constant 0 : i32
    %c0_i32_0 = arith.constant 0 : i32
    %c0_i32_1 = arith.constant 0 : i32
    return %arg0, %c0_i32, %c0_i32_0 : i32, i32, i32
  }
  func.func @transform_1(%arg0: i32) -> (i32, i32, i32) {
    %c0_i32 = arith.constant 0 : i32
    %c0_i32_0 = arith.constant 0 : i32
    %c0_i32_1 = arith.constant 0 : i32
    return %arg0, %c0_i32, %c0_i32_0 : i32, i32, i32
  }
}

</mosaic_0001>

<llo_original>
// kernel: tpu_custom_call.1
$region0: #{tpu_custom_call.1}
  #allocation0 [shape = 'u32[]', space=smem, size = 0x4, offset = 0x4, fixed_abs, tag = 'smem constant byte address 0x4 - core index']
  #allocation1 [shape = 'u32[144,128]{1,0:T(1,128)}', space=vmem, size = 0x12000, scoped, tag = 'internal scratch']
  %s0 = inlined_call_operand.vmem [shape: f32[2,12,24], index: 0, kind: input, shape index: {}]
  %s1 = inlined_call_operand.hbm [shape: f32[2,16,32], index: 1, kind: output, shape index: {}]
  %s2 = sld [smem:[#allocation0]]
  $region37: #{tpu_custom_call.1} parent=0
    _
  %s4 = ssub.s32 1, %s2
  %s5 = scalar_select 0, %s4, %s2
  $region1: #{tpu_custom_call.1} parent=0
    #allocation2 [shape = 'u8[16384]{0}', space=vmem, size = 0x4000, scoped, tag = 'output window, operand 0']
    #allocation3 [shape = 's32[2]{0}', space=sflag, size = 0x8, scoped, tag = 'scoped memory for tpu_custom_call.1']
    %6 = vsyncpa [#allocation3], 0
    %s7 = scalar_lea.sflag [#allocation3], 1
    %8 = vsyncpa %s7, 0
    loop: start=0, step=1, limit=4
    $region2: #{tpu_custom_call.1} parent=1 // loop_pre_header
      _
    $region3: #{tpu_custom_call.1} parent=1 // loop_header
      %s10 = sphi 0, %s14
      %p11 = scmp.ge.s32.totalorder %s10, 4
      %s20 = sphi 0, %s22
      %s23 = sphi 0, %s20
      %s24 = sphi 0, %s23
      %s40 = sphi 0, %s24
      %s46 = sphi 0, %s48
      %s49 = sphi 0, %s46
      %s50 = sphi 0, %s49
      %s66 = sphi 0, %s50
    $region4: #{tpu_custom_call.1} parent=1 // loop_header_branch
      %13 = sbr.rel (%p11) target = $region8
    $region5: #{tpu_custom_call.1} parent=1 // loop_body
      %s15 = ssub.s32 %s10, 1
      %s16 = ssub.s32 %s10, 2
      %s17 = sadd.s32 %s10, 1
      %s18 = ssub.s32 %s10, %s17
      %p19 = scmp.eq.s32.totalorder %s18, 0
      %s21 = sadd.s32 %s20, 1
      %s22 = scalar_select %p19, %s20, %s21
      %p25 = pneg %p19
      %p26 = scmp.eq.s32.totalorder %s10, 1
      %p27 = por %p25, %p26
      %p28 = scmp.ne.s32.totalorder %s20, %s23
      %p29 = scmp.eq.s32.totalorder %s10, 0
      %p30 = por %p28, %p29
      %p31 = scmp.ne.s32.totalorder %s20, %s23
      %p32 = scmp.eq.s32.totalorder %s15, 1
      %p33 = por %p31, %p32
      %p34 = scmp.ne.s32.totalorder %s23, %s24
      %p35 = scmp.eq.s32.totalorder %s15, 0
      %p36 = por %p34, %p35
      %p37 = scmp.ne.s32.totalorder %s23, %s24
      %p38 = scmp.eq.s32.totalorder %s16, 1
      %p39 = por %p37, %p38
      %p41 = scmp.ne.s32.totalorder %s24, %s40
      %p42 = scmp.eq.s32.totalorder %s16, 0
      %p43 = por %p41, %p42
      %s44 = ssub.s32 %s10, %s17
      %p45 = scmp.eq.s32.totalorder %s44, 0
      %s47 = sadd.s32 %s46, 1
      %s48 = scalar_select %p45, %s46, %s47
      %p51 = pneg %p45
      %p52 = scmp.eq.s32.totalorder %s10, 1
      %p53 = por %p51, %p52
      %p54 = scmp.ne.s32.totalorder %s46, %s49
      %p55 = scmp.eq.s32.totalorder %s10, 0
      %p56 = por %p54, %p55
      %p57 = scmp.ne.s32.totalorder %s46, %s49
      %p58 = scmp.eq.s32.totalorder %s15, 1
      %p59 = por %p57, %p58
      %p60 = scmp.ne.s32.totalorder %s49, %s50
      %p61 = scmp.eq.s32.totalorder %s15, 0
      %p62 = por %p60, %p61
      %p63 = scmp.ne.s32.totalorder %s49, %s50
      %p64 = scmp.eq.s32.totalorder %s16, 1
      %p65 = por %p63, %p64
      %p67 = scmp.ne.s32.totalorder %s50, %s66
      %p68 = scmp.eq.s32.totalorder %s16, 0
      %p69 = por %p67, %p68
      %p70 = scmp.le.s32.totalorder 1, %s10
      %p71 = scmp.lt.s32.totalorder %s10, 3
      %p72 = pnand %p70, %p71
      %p73 = pneg %p72
      // Predicated region
      $region9: #{tpu_custom_call.1} parent=5 // pred_check
        _
      $region10: #{tpu_custom_call.1} parent=5 // pred_check_branch
        %75 = sbr.rel (%p72) target = $region12
      $region11: #{tpu_custom_call.1} parent=5 // pred_region
        %s76 = ssub.s32 %s10, 1
      $region12: #{tpu_custom_call.1} parent=5 // pred_fallthru
        _
      %p77 = scmp.lt.s32.totalorder %s10, 2
      // Predicated region
      $region13: #{tpu_custom_call.1} parent=5 // pred_check
        %p78 = pneg %p77
      $region14: #{tpu_custom_call.1} parent=5 // pred_check_branch
        %80 = sbr.rel (%p78) target = $region16
      $region15: #{tpu_custom_call.1} parent=5 // pred_region
        // Predicated region
        $region17: #{tpu_custom_call.1} parent=15 // pred_check
          %p81 = pneg %p30
        $region18: #{tpu_custom_call.1} parent=15 // pred_check_branch
          %83 = sbr.rel (%p81) target = $region20
        $region19: #{tpu_custom_call.1} parent=15 // pred_region
          %p84 = scmp.lt.s32.totalorder %s10, 1
          %s85 = scalar_select %p84, %s10, 1
          %s86 = smul.addr %s85, 2
          %s87 = smul.addr %s86, 8
          %s88 = scalar_lea.vmem %s0, %s87
        $region20: #{tpu_custom_call.1} parent=15 // pred_fallthru
          _
      $region16: #{tpu_custom_call.1} parent=5 // pred_fallthru
        _
      %p89 = scmp.le.s32.totalorder 1, %s10
      %p90 = scmp.lt.s32.totalorder %s10, 3
      %p91 = pnand %p89, %p90
      %p92 = pneg %p91
      // Predicated region
      $region21: #{tpu_custom_call.1} parent=5 // pred_check
        _
      $region22: #{tpu_custom_call.1} parent=5 // pred_check_branch
        %94 = sbr.rel (%p91) target = $region24
      $region23: #{tpu_custom_call.1} parent=5 // pred_region
        %s95 = ssub.s32 %s10, 1
        %p96 = scmp.lt.s32.totalorder %s15, 1
        %s97 = scalar_select %p96, %s15, 1
        %s98 = smul.addr %s97, 2
        %s99 = smul.addr %s98, 8
        %s100 = scalar_lea.vmem %s0, %s99
        %p101 = pneg %p36
        %p102 = pneg %p33
        %p103 = pneg %p62
        %p104 = pneg %p59
        %s105 = sand.u32 %s49, 1
        %s106 = scalar_lea.sflag [#allocation3], %s105
        %s107 = sand.u32 %s49, 1
        %s108 = smul.addr %s107, 16
        %s109 = scalar_lea.vmem [#allocation2], %s108
        %p110 = scmp.lt.s32.totalorder %s15, 1
        %s111 = scalar_select %p110, %s15, 1
        %s112 = smul.addr %s111, 2
        %s113 = smul.addr %s112, 8
        %s114 = scalar_lea.vmem %s0, %s113
        %v115 = vld [vmem:[%s114] sm:$0xff]
        %v116 = vld [vmem:[%s114 + $0x8] sm:$0xf]
        %119 = vrot.lane.b32.xlu0 %v115, 4
        %v120 = vpop.permute.xlu0 %119
        %121 = vrot.lane.b32.xlu0 %v116, 4
        %v122 = vpop.permute.xlu0 %121
        %vm125 = vcmask 31744
        %v126 = vsel %vm125, 0.0, %v120
        %v127 = vsel %vm125, 0.0, %v122
        %vm128 = vcmask 228352
        %v129 = vsel %vm128, %v126, 0.0
        %v130 = vsel %vm128, %v127, 0.0
        %vm133 = vcmask 1041408
        %v134 = vrot.slane %v129, 6
        %v135 = vrot.slane %v130, 6
        %v136 = vsel %vm133, %v134, %v135
        %v139 = vsel %vm133, 0.0, %v134
        %vm140 = vcmask 1045504
        %v141 = vsel %vm140, %v136, 0.0
        %vm142 = vcmask 261120
        %143 = vst.msk [vmem:[%s109] sm:$0xff] %vm142, %v139
        %144 = vst.msk [vmem:[%s109 + $0x8] sm:$0xff] %vm142, %v141
        %s145 = sand.u32 %s49, 1
        %s146 = scalar_lea.sflag [#allocation3], %s145
        %s147 = sand.u32 %s49, 1
        %s148 = smul.addr %s147, 16
        %s149 = scalar_lea.vmem [#allocation2], %s148
        // Predicated region
        $region25: #{tpu_custom_call.1} parent=23 // pred_check
          %p150 = pneg %p59
        $region26: #{tpu_custom_call.1} parent=23 // pred_check_branch
          %152 = sbr.rel (%p150) target = $region28
        $region27: #{tpu_custom_call.1} parent=23 // pred_region
          %s154 = ssub.s32 256, 256
          %155 = vsyncadd %s146, %s154
          %s156 = smul.addr %s15, 2
          %s157 = smul.addr %s156, 128
          %s158 = scalar_lea.hbm %s1, %s157
          %s159 = sshll.u32 %s149, 4
          %s160 = int_to_ptr.vmem [resolvable:$true] %s159
          %165 = dma.vmem_to_hbm [thread:$0]  %s160, 256, %s158, %s146, 128, 128, 8
        $region28: #{tpu_custom_call.1} parent=23 // pred_fallthru
          _
      $region24: #{tpu_custom_call.1} parent=5 // pred_fallthru
        _
      %p166 = scmp.le.s32.totalorder 2, %s10
      // Predicated region
      $region29: #{tpu_custom_call.1} parent=5 // pred_check
        %p167 = pneg %p166
      $region30: #{tpu_custom_call.1} parent=5 // pred_check_branch
        %169 = sbr.rel (%p167) target = $region32
      $region31: #{tpu_custom_call.1} parent=5 // pred_region
        %s170 = ssub.s32 %s10, 2
        // Predicated region
        $region33: #{tpu_custom_call.1} parent=31 // pred_check
          %p171 = pneg %p65
        $region34: #{tpu_custom_call.1} parent=31 // pred_check_branch
          %173 = sbr.rel (%p171) target = $region36
        $region35: #{tpu_custom_call.1} parent=31 // pred_region
          %s174 = sand.u32 %s50, 1
          %s175 = scalar_lea.sflag [#allocation3], %s174
          %s176 = sand.u32 %s50, 1
          %s177 = smul.addr %s176, 16
          %s178 = scalar_lea.vmem [#allocation2], %s177
          %179 = dma.done %s175, 256
        $region36: #{tpu_custom_call.1} parent=31 // pred_fallthru
          _
      $region32: #{tpu_custom_call.1} parent=5 // pred_fallthru
        _
    $region6: #{tpu_custom_call.1} parent=1 // loop_footer
      %s14 = sadd.s32 1, %s10
    $region7: #{tpu_custom_call.1} parent=1 // loop_footer_branch
      %9 = sbr.rel target = $region3
    $region8: #{tpu_custom_call.1} parent=1 // loop_exit
      _
    %180 = vsyncpa [#allocation3], 1
    %s181 = scalar_lea.sflag [#allocation3], 1
    %182 = vsyncpa %s181, 1

</llo_original>
